<compile_context>
chip_gen: v6e
topology: v6e:2x2x1
jax: 0.10.0
libtpu: 0.0.40
codegen_flags: <defaults>
</compile_context>

<pallas_src>
import math
import functools

import jax
import jax.numpy as jnp
from jax.experimental import pallas as pl
from jax.experimental.pallas import tpu as pltpu


# -----------------------------------------------------------------------------
# Kernel 1: LayerNorm + fused QKV projection.
#   one grid step = one (batch, row-tile); emits bf16 qkv rows (TR, 3H).
#   1/sqrt(d_k) is already folded into the Wq / bq slices of wqkv / bqkv.
# -----------------------------------------------------------------------------
def _ln_qkv_kernel(x_ref, gamma_ref, beta_ref, wqkv_ref, bqkv_ref, qkv_ref,
                   *, eps: float):
    x = x_ref[0].astype(jnp.float32)                          # (TR, H), f32 VPU math
    mean = jnp.mean(x, axis=-1, keepdims=True)
    var = jnp.mean((x - mean) ** 2, axis=-1, keepdims=True)   # biased variance (LN)
    xn = (x - mean) * jax.lax.rsqrt(var + eps)
    xn = xn * gamma_ref[0] + beta_ref[0]                      # (TR, H)

    # Single wide MXU matmul: bf16 operands, f32 accumulation, bias in f32.
    qkv = jnp.dot(xn.astype(jnp.bfloat16), wqkv_ref[...],
                  preferred_element_type=jnp.float32) + bqkv_ref[0]
    qkv_ref[0] = qkv.astype(qkv_ref.dtype)                    # stored bf16 (half HBM traffic)


# -----------------------------------------------------------------------------
# Kernel 2: flash-style attention (online softmax over kv tiles) + output
#           projection + residual add.  Grid = (batch, q_tile, kv_tile).
#   NOTE: the kv axis MUST stay the innermost grid axis and MUST stay
#   "arbitrary" — the flash accumulators are re-initialized at ki==0 and
#   finalized at ki==last; reordering the grid would corrupt results.
# -----------------------------------------------------------------------------
def _flash_attn_out_kernel(q_ref, kT_ref, v_ref, x_ref, wo_ref, bo_ref, out_ref,
                           m_sc, l_sc, acc_sc):
    ki = pl.program_id(2)

    @pl.when(ki == 0)
    def _init():
        m_sc[...] = jnp.full_like(m_sc[...], -jnp.inf)
        l_sc[...] = jnp.zeros_like(l_sc[...])
        acc_sc[...] = jnp.zeros_like(acc_sc[...])

    q = q_ref[0]                                              # (h, TQ, d_k)  bf16 (pre-scaled)
    kT = kT_ref[0]                                            # (h, d_k, TK)  bf16, lane-dense TK
    v = v_ref[0]                                              # (h, TK, d_k)  bf16

    # Head-batched QK^T on the MXU, f32 accumulate. No *scale (folded into Wq),
    # no in-kernel K transpose (K stored (d_k, S)).
    s = jnp.einsum('hqd,hdk->hqk', q, kT,
                   preferred_element_type=jnp.float32)        # (h, TQ, TK) f32

    m_prev = m_sc[...]                                        # (h, TQ, 1)
    m_new = jnp.maximum(m_prev, jnp.max(s, axis=-1, keepdims=True))
    alpha = jnp.exp(m_prev - m_new)
    # exactly one exp per score element, f32 for accuracy (EUP-bound at d_k<=64)
    p = jnp.exp(s - m_new)                                    # (h, TQ, TK) f32
    l_sc[...] = alpha * l_sc[...] + jnp.sum(p, axis=-1, keepdims=True)
    acc_sc[...] = alpha * acc_sc[...] + jnp.einsum(
        'hqk,hkd->hqd', p.astype(v.dtype), v,                 # bf16 p feeds the MXU
        preferred_element_type=jnp.float32)                   # (h, TQ, d_k)
    m_sc[...] = m_new

    @pl.when(ki == pl.num_programs(2) - 1)
    def _finalize():
        heads = wo_ref.shape[0]                               # static
        # Softmax denominator on the EUP slot (approx reciprocal ~ free).
        inv_l = pl.reciprocal(l_sc[...], approx=True)         # (h, TQ, 1)
        ctx = (acc_sc[...] * inv_l).astype(jnp.bfloat16)      # (h, TQ, d_k)
        # Output projection accumulated per head directly into a (TQ, H) f32
        # (no (heads, TQ, H) intermediate, no cross-sublane sum, no lane slices).
        proj = x_ref[0].astype(jnp.float32) + bo_ref[0]       # residual + bias, (TQ, H)
        for h in range(heads):                                # static unrolled loop
            proj = proj + jnp.dot(ctx[h], wo_ref[h],
                                  preferred_element_type=jnp.float32)
        # SublayerConnection residual; both Dropouts are identity in eval mode.
        out_ref[0] = proj.astype(out_ref.dtype)


# -----------------------------------------------------------------------------
# Wrapper helpers
# -----------------------------------------------------------------------------
def _pick_tile(dim: int, target: int, align: int) -> int:
    """Largest divisor of `dim` <= target that is a multiple of `align`;
    else the largest multiple-of-8 divisor <= target; else the full dim
    (full-extent blocks are exempt from the (8,128) rule)."""
    best_aligned, best_8 = None, None
    for t in range(1, dim + 1):
        if dim % t != 0 or t > target:
            continue
        if t % align == 0:
            best_aligned = t
        if t % 8 == 0:
            best_8 = t
    return best_aligned or best_8 or dim


def _vmem_capacity_bytes() -> int:
    try:
        return int(pltpu.get_tpu_info().vmem_capacity_bytes)
    except Exception:
        return 128 * 1024 * 1024   # v5e/v6e default if query unavailable


# -----------------------------------------------------------------------------
# Wrapper
# -----------------------------------------------------------------------------
def atten_block(x, params, *, heads: int, eps: float = 1e-6,
                tq: int = None, tkv: int = None,
                vmem_limit_bytes: int = None):
    """x: (B, S, H) float32. params: dict (see init_params)."""
    B, S, H = x.shape
    assert H % heads == 0
    d_k = H // heads
    scale = 1.0 / math.sqrt(d_k)

    # ---- per-generation VMEM limit and tile targets ----
    vmem_cap = _vmem_capacity_bytes()
    if vmem_limit_bytes is None:
        # v5e/v6e (128 MiB physical) -> ~100 MiB; v7x (64 MiB physical) -> ~56 MiB.
        vmem_limit_bytes = min((vmem_cap * 7) // 8, 100 * 1024 * 1024)

    if tq is None or tkv is None:
        big_vmem = vmem_cap >= 96 * 1024 * 1024
        tq_target = 256 if big_vmem else 128
        tkv_target = 512 if big_vmem else 256
        # keep the per-step f32 (heads, tq, tkv) score/prob temporaries <= ~4 MiB
        budget = 4 * 1024 * 1024
        while heads * tq_target * tkv_target * 4 > budget and tkv_target > 128:
            tkv_target //= 2
        while heads * tq_target * tkv_target * 4 > budget and tq_target > 64:
            tq_target //= 2
        if tq is None:
            tq = _pick_tile(S, tq_target, 16)     # sublane-friendly (bf16 packs 16)
        if tkv is None:
            tkv = _pick_tile(S, tkv_target, 128)  # lane-friendly
    assert S % tq == 0 and S % tkv == 0

    # Weight plumbing (pure layout work, done once in the wrapper):
    #   1/sqrt(d_k) folded into Wq columns AND bq (so q = (xn@Wq + bq)*scale exactly),
    #   fused QKV weight (H, 3H) bf16, fused bias (1, 3H) f32,
    #   Wo reshaped head-major (heads, d_k, H) bf16.
    wqkv = jnp.concatenate([params["wq"] * scale, params["wk"], params["wv"]],
                           axis=1).astype(jnp.bfloat16)                    # (H, 3H)
    bqkv = jnp.concatenate([params["bq"] * scale, params["bk"], params["bv"]],
                           axis=1)                                          # (1, 3H) f32
    wo_h = params["wo"].reshape(heads, d_k, H).astype(jnp.bfloat16)         # (h, d_k, H)

    # ---------------- kernel 1: LN + fused QKV projection ----------------
    qkv = pl.pallas_call(
        functools.partial(_ln_qkv_kernel, eps=eps),
        out_shape=jax.ShapeDtypeStruct((B, S, 3 * H), jnp.bfloat16),
        grid_spec=pltpu.PrefetchScalarGridSpec(
            num_scalar_prefetch=0,
            grid=(B, S // tq),
            in_specs=[
                pl.BlockSpec((1, tq, H), lambda b, i: (b, i, 0)),            # x
                pl.BlockSpec((1, H), lambda b, i: (0, 0),
                             pipeline_mode=pl.Buffered(1)),                  # gamma
                pl.BlockSpec((1, H), lambda b, i: (0, 0),
                             pipeline_mode=pl.Buffered(1)),                  # beta
                pl.BlockSpec((H, 3 * H), lambda b, i: (0, 0),
                             pipeline_mode=pl.Buffered(1)),                  # Wqkv (bf16)
                pl.BlockSpec((1, 3 * H), lambda b, i: (0, 0),
                             pipeline_mode=pl.Buffered(1)),                  # bqkv
            ],
            out_specs=pl.BlockSpec((1, tq, 3 * H), lambda b, i: (b, i, 0)),
        ),
        compiler_params=pltpu.CompilerParams(
            dimension_semantics=("parallel", "parallel"),
            vmem_limit_bytes=vmem_limit_bytes),
    )(x, params["gamma"], params["beta"], wqkv, bqkv)

    # Head-major layouts for the attention kernel (layout plumbing only):
    #   q, v: (B, heads, S, d_k);  K pre-transposed: (B, heads, d_k, S) so K tiles
    #   are lane-dense along tkv and QK^T needs no in-kernel transpose.
    # TODO(synk): this split/transpose is one extra HBM round trip of the bf16 qkv.
    q, k, v = jnp.split(qkv, 3, axis=-1)
    qh = q.reshape(B, S, heads, d_k).transpose(0, 2, 1, 3)   # (B, h, S, d_k)
    khT = k.reshape(B, S, heads, d_k).transpose(0, 2, 3, 1)  # (B, h, d_k, S)
    vh = v.reshape(B, S, heads, d_k).transpose(0, 2, 1, 3)   # (B, h, S, d_k)

    # -------- kernel 2: flash attention + output projection + residual --------
    out = pl.pallas_call(
        _flash_attn_out_kernel,
        out_shape=jax.ShapeDtypeStruct((B, S, H), x.dtype),
        grid_spec=pltpu.PrefetchScalarGridSpec(
            num_scalar_prefetch=0,
            grid=(B, S // tq, S // tkv),
            in_specs=[
                pl.BlockSpec((1, heads, tq, d_k), lambda b, qi, ki: (b, 0, qi, 0)),   # q
                pl.BlockSpec((1, heads, d_k, tkv), lambda b, qi, ki: (b, 0, 0, ki)),  # K^T
                pl.BlockSpec((1, heads, tkv, d_k), lambda b, qi, ki: (b, 0, ki, 0)),  # v
                pl.BlockSpec((1, tq, H), lambda b, qi, ki: (b, qi, 0)),               # x (residual)
                pl.BlockSpec((heads, d_k, H), lambda b, qi, ki: (0, 0, 0),
                             pipeline_mode=pl.Buffered(1)),                           # Wo (bf16)
                pl.BlockSpec((1, H), lambda b, qi, ki: (0, 0),
                             pipeline_mode=pl.Buffered(1)),                           # bo
            ],
            out_specs=pl.BlockSpec((1, tq, H), lambda b, qi, ki: (b, qi, 0)),
            scratch_shapes=[
                pltpu.VMEM((heads, tq, 1), jnp.float32),     # running max m
                pltpu.VMEM((heads, tq, 1), jnp.float32),     # running sum l
                pltpu.VMEM((heads, tq, d_k), jnp.float32),   # output accumulator
            ],
        ),
        compiler_params=pltpu.CompilerParams(
            # kv axis must be last + "arbitrary" (flash accumulators carried across it)
            dimension_semantics=("parallel", "parallel", "arbitrary"),
            vmem_limit_bytes=vmem_limit_bytes),
    )(qh, khT, vh, x, wo_h, params["bo"])
    return out


def init_params(key, hidden):
    ks = jax.random.split(key, 4)
    std = 0.02
    return {
        "wq": jax.random.normal(ks[0], (hidden, hidden), jnp.float32) * std,
        "wk": jax.random.normal(ks[1], (hidden, hidden), jnp.float32) * std,
        "wv": jax.random.normal(ks[2], (hidden, hidden), jnp.float32) * std,
        "wo": jax.random.normal(ks[3], (hidden, hidden), jnp.float32) * std,
        "bq": jnp.zeros((1, hidden), jnp.float32),
        "bk": jnp.zeros((1, hidden), jnp.float32),
        "bv": jnp.zeros((1, hidden), jnp.float32),
        "bo": jnp.zeros((1, hidden), jnp.float32),
        "gamma": jnp.ones((1, hidden), jnp.float32),
        "beta": jnp.zeros((1, hidden), jnp.float32),
    }


def reference(x, params, heads, eps=1e-6):
    # pure-JAX f32 reference matching the PyTorch module in eval mode
    mean = jnp.mean(x, axis=-1, keepdims=True)
    var = jnp.mean((x - mean) ** 2, axis=-1, keepdims=True)
    xn = (x - mean) / jnp.sqrt(var + eps) * params["gamma"][0] + params["beta"][0]
    B, S, H = x.shape
    d_k = H // heads
    q = xn @ params["wq"] + params["bq"][0]
    k = xn @ params["wk"] + params["bk"][0]
    v = xn @ params["wv"] + params["bv"][0]

    def split(t):
        return t.reshape(B, S, heads, d_k).transpose(0, 2, 1, 3)

    qh, kh, vh = split(q), split(k), split(v)
    s = jnp.einsum("bhqd,bhkd->bhqk", qh, kh) / math.sqrt(d_k)
    p = jax.nn.softmax(s, axis=-1)
    ctx = jnp.einsum("bhqk,bhkd->bhqd", p, vh).transpose(0, 2, 1, 3).reshape(B, S, H)
    proj = ctx @ params["wo"] + params["bo"][0]
    return x + proj


if __name__ == "__main__":
    B, S, H, HEADS = 2, 8, 32, 4
    key = jax.random.PRNGKey(0)
    kx, kp = jax.random.split(key)
    x = jax.random.normal(kx, (B, S, H), jnp.float32)
    params = init_params(kp, H)

    out = atten_block(x, params, heads=HEADS)
    out = jax.block_until_ready(out)

    ref = reference(x, params, HEADS)
    assert out.shape == (B, S, H)
    # bf16 MXU operands with f32 accumulation -> loosened tolerance vs f32 reference
    assert jnp.allclose(out, ref, atol=2e-2, rtol=2e-2), "mismatch vs JAX reference"
    print("KERNEL_OK")
</pallas_src>

<mosaic_0001>
module attributes {stable_mosaic.version = 11 : i64} {
  func.func @_ln_qkv_kernel(%arg0: i32, %arg1: i32, %arg2: memref<1x8x32xf32, #tpu.memory_space<vmem>>, %arg3: memref<1x32xf32, #tpu.memory_space<vmem>>, %arg4: memref<1x32xf32, #tpu.memory_space<vmem>>, %arg5: memref<32x96xbf16, #tpu.memory_space<vmem>>, %arg6: memref<1x96xf32, #tpu.memory_space<vmem>>, %arg7: memref<1x8x96xbf16, #tpu.memory_space<vmem>>) attributes {dimension_semantics = [#tpu.dimension_semantics<parallel>, #tpu.dimension_semantics<parallel>], iteration_bounds = array<i64: 2, 1>, scalar_prefetch = 0 : i64, scratch_operands = 0 : i64, tpu.core_type = #tpu.core_type<tc>, window_params = [{transform_indices = @transform_0, window_bounds = array<i64: 1, 8, 32>}, {pipeline_mode = #tpu.pipeline_mode<synchronous>, transform_indices = @transform_1, window_bounds = array<i64: 1, 32>}, {pipeline_mode = #tpu.pipeline_mode<synchronous>, transform_indices = @transform_2, window_bounds = array<i64: 1, 32>}, {pipeline_mode = #tpu.pipeline_mode<synchronous>, transform_indices = @transform_3, window_bounds = array<i64: 32, 96>}, {pipeline_mode = #tpu.pipeline_mode<synchronous>, transform_indices = @transform_4, window_bounds = array<i64: 1, 96>}, {transform_indices = @transform_5, window_bounds = array<i64: 1, 8, 96>}]} {
    %c0 = arith.constant 0 : index
    %c0_0 = arith.constant 0 : index
    %c0_1 = arith.constant 0 : index
    %0 = vector.load %arg2[%c0, %c0_0, %c0_1] : memref<1x8x32xf32, #tpu.memory_space<vmem>>, vector<1x8x32xf32>
    %1 = vector.shape_cast %0 : vector<1x8x32xf32> to vector<8x32xf32>
    %cst = arith.constant dense<0.000000e+00> : vector<8xf32>
    %2 = vector.multi_reduction <add>, %1, %cst [1] : vector<8x32xf32> to vector<8xf32>
    %3 = vector.shape_cast %2 : vector<8xf32> to vector<8x1xf32>
    %cst_2 = arith.constant 3.200000e+01 : f32
    %4 = vector.broadcast %cst_2 : f32 to vector<8x1xf32>
    %5 = arith.divf %3, %4 : vector<8x1xf32>
    %6 = vector.broadcast %5 : vector<8x1xf32> to vector<8x32xf32>
    %7 = arith.subf %1, %6 : vector<8x32xf32>
    %8 = arith.mulf %7, %7 : vector<8x32xf32>
    %cst_3 = arith.constant dense<0.000000e+00> : vector<8xf32>
    %9 = vector.multi_reduction <add>, %8, %cst_3 [1] : vector<8x32xf32> to vector<8xf32>
    %10 = vector.shape_cast %9 : vector<8xf32> to vector<8x1xf32>
    %cst_4 = arith.constant 3.200000e+01 : f32
    %11 = vector.broadcast %cst_4 : f32 to vector<8x1xf32>
    %12 = arith.divf %10, %11 : vector<8x1xf32>
    %13 = vector.broadcast %5 : vector<8x1xf32> to vector<8x32xf32>
    %14 = arith.subf %1, %13 : vector<8x32xf32>
    %cst_5 = arith.constant 9.99999997E-7 : f32
    %15 = vector.broadcast %cst_5 : f32 to vector<8x1xf32>
    %16 = arith.addf %12, %15 : vector<8x1xf32>
    %17 = math.rsqrt %16 : vector<8x1xf32>
    %18 = vector.broadcast %17 : vector<8x1xf32> to vector<8x32xf32>
    %19 = arith.mulf %14, %18 : vector<8x32xf32>
    %c0_6 = arith.constant 0 : index
    %c0_7 = arith.constant 0 : index
    %20 = vector.load %arg3[%c0_6, %c0_7] : memref<1x32xf32, #tpu.memory_space<vmem>>, vector<1x32xf32>
    %21 = vector.shape_cast %20 : vector<1x32xf32> to vector<32xf32>
    %22 = vector.shape_cast %21 : vector<32xf32> to vector<1x32xf32>
    %23 = vector.broadcast %22 : vector<1x32xf32> to vector<8x32xf32>
    %24 = arith.mulf %19, %23 : vector<8x32xf32>
    %c0_8 = arith.constant 0 : index
    %c0_9 = arith.constant 0 : index
    %25 = vector.load %arg4[%c0_8, %c0_9] : memref<1x32xf32, #tpu.memory_space<vmem>>, vector<1x32xf32>
    %26 = vector.shape_cast %25 : vector<1x32xf32> to vector<32xf32>
    %27 = vector.shape_cast %26 : vector<32xf32> to vector<1x32xf32>
    %28 = vector.broadcast %27 : vector<1x32xf32> to vector<8x32xf32>
    %29 = arith.addf %24, %28 : vector<8x32xf32>
    %30 = arith.truncf %29 : vector<8x32xf32> to vector<8x32xbf16>
    %c0_10 = arith.constant 0 : index
    %c0_11 = arith.constant 0 : index
    %31 = vector.load %arg5[%c0_10, %c0_11] : memref<32x96xbf16, #tpu.memory_space<vmem>>, vector<32x96xbf16>
    %cst_12 = arith.constant dense<0.000000e+00> : vector<8x96xf32>
    %32 = tpu.matmul %30, %31, %cst_12 {dimension_numbers = #tpu.dot_dimension_numbers<[1], [0], [0], [1], [0, 0, 1, 1], [], []>} : vector<8x32xbf16>, vector<32x96xbf16>, vector<8x96xf32> -> vector<8x96xf32>
    %c0_13 = arith.constant 0 : index
    %c0_14 = arith.constant 0 : index
    %33 = vector.load %arg6[%c0_13, %c0_14] : memref<1x96xf32, #tpu.memory_space<vmem>>, vector<1x96xf32>
    %34 = vector.shape_cast %33 : vector<1x96xf32> to vector<96xf32>
    %35 = vector.shape_cast %34 : vector<96xf32> to vector<1x96xf32>
    %36 = vector.broadcast %35 : vector<1x96xf32> to vector<8x96xf32>
    %37 = arith.addf %32, %36 : vector<8x96xf32>
    %38 = arith.truncf %37 : vector<8x96xf32> to vector<8x96xbf16>
    %c0_15 = arith.constant 0 : index
    %c0_16 = arith.constant 0 : index
    %c0_17 = arith.constant 0 : index
    %39 = vector.load %arg7[%c0_15, %c0_16, %c0_17] : memref<1x8x96xbf16, #tpu.memory_space<vmem>>, vector<1x8x96xbf16>
    %40 = vector.shape_cast %39 : vector<1x8x96xbf16> to vector<8x96xbf16>
    %41 = vector.shape_cast %38 : vector<8x96xbf16> to vector<1x8x96xbf16>
    tpu.vector_store %arg7[%c0_15, %c0_16, %c0_17], %41 {strides = array<i32>} : memref<1x8x96xbf16, #tpu.memory_space<vmem>>, vector<1x8x96xbf16>,
    return
  }
  func.func @transform_0(%arg0: i32, %arg1: i32) -> (i32, i32, i32) {
    %c0_i32 = arith.constant 0 : i32
    %c0_i32_0 = arith.constant 0 : i32
    return %arg0, %arg1, %c0_i32 : i32, i32, i32
  }
  func.func @transform_1(%arg0: i32, %arg1: i32) -> (i32, i32) {
    %c0_i32 = arith.constant 0 : i32
    %c0_i32_0 = arith.constant 0 : i32
    %c0_i32_1 = arith.constant 0 : i32
    return %c0_i32, %c0_i32_0 : i32, i32
  }
  func.func @transform_2(%arg0: i32, %arg1: i32) -> (i32, i32) {
    %c0_i32 = arith.constant 0 : i32
    %c0_i32_0 = arith.constant 0 : i32
    %c0_i32_1 = arith.constant 0 : i32
    return %c0_i32, %c0_i32_0 : i32, i32
  }
  func.func @transform_3(%arg0: i32, %arg1: i32) -> (i32, i32) {
    %c0_i32 = arith.constant 0 : i32
    %c0_i32_0 = arith.constant 0 : i32
    %c0_i32_1 = arith.constant 0 : i32
    return %c0_i32, %c0_i32_0 : i32, i32
  }
  func.func @transform_4(%arg0: i32, %arg1: i32) -> (i32, i32) {
    %c0_i32 = arith.constant 0 : i32
    %c0_i32_0 = arith.constant 0 : i32
    %c0_i32_1 = arith.constant 0 : i32
    return %c0_i32, %c0_i32_0 : i32, i32
  }
  func.func @transform_5(%arg0: i32, %arg1: i32) -> (i32, i32, i32) {
    %c0_i32 = arith.constant 0 : i32
    %c0_i32_0 = arith.constant 0 : i32
    return %arg0, %arg1, %c0_i32 : i32, i32, i32
  }
}

</mosaic_0001>

<llo_original>
// kernel: tpu_custom_call.1
$region0: #{tpu_custom_call.1}
  #allocation0 [shape = 'u32[]', space=smem, size = 0x4, offset = 0x4, fixed_abs, tag = 'smem constant byte address 0x4 - core index']
  #allocation1 [shape = 'u32[144,128]{1,0:T(1,128)}', space=vmem, size = 0x12000, scoped, tag = 'internal scratch']
  %s0 = inlined_call_operand.hbm [shape: f32[2,8,32], index: 0, kind: input, shape index: {}]
  %s1 = inlined_call_operand.vmem [shape: f32[1,32], index: 1, kind: input, shape index: {}]
  %s2 = inlined_call_operand.vmem [shape: f32[1,32], index: 2, kind: input, shape index: {}]
  %s3 = inlined_call_operand.hbm [shape: bf16[32,96], index: 3, kind: input, shape index: {}]
  %s4 = inlined_call_operand.vmem [shape: f32[1,96], index: 4, kind: input, shape index: {}]
  %s5 = inlined_call_operand.hbm [shape: bf16[2,8,96], index: 5, kind: output, shape index: {}]
  %s6 = sld [smem:[#allocation0]]
  $region61: #{tpu_custom_call.1} parent=0
    _
  %s8 = ssub.s32 1, %s6
  %s9 = scalar_select 0, %s8, %s6
  $region1: #{tpu_custom_call.1} parent=0
    #allocation2 [shape = 'u8[8192]{0}', space=vmem, size = 0x2000, scoped, tag = 'input window, operand 0']
    #allocation3 [shape = 's32[2]{0}', space=sflag, size = 0x8, scoped, tag = 'scoped memory for tpu_custom_call.1']
    #allocation4 [shape = 's32[2]{0}', space=sflag, size = 0x8, scoped, tag = 'scoped memory for tpu_custom_call.1']
    #allocation5 [shape = 'u8[8192]{0}', space=vmem, size = 0x2000, scoped, tag = 'input window, operand 3, single buffered']
    #allocation6 [shape = 's32[1]{0}', space=sflag, size = 0x4, scoped, tag = 'scoped memory for tpu_custom_call.1']
    #allocation7 [shape = 'u8[4096]{0}', space=vmem, size = 0x1000, scoped, tag = 'output window, operand 0']
    %10 = vsyncpa [#allocation3], 0
    %s11 = scalar_lea.sflag [#allocation3], 1
    %12 = vsyncpa %s11, 0
    %13 = vsyncpa [#allocation6], 0
    %14 = vsyncpa [#allocation4], 0
    %s15 = scalar_lea.sflag [#allocation4], 1
    %16 = vsyncpa %s15, 0
    loop: start=0, step=1, limit=4
    $region2: #{tpu_custom_call.1} parent=1 // loop_pre_header
      _
    $region3: #{tpu_custom_call.1} parent=1 // loop_header
      %s18 = sphi 0, %s22
      %p19 = scmp.ge.s32.totalorder %s18, 4
      %s25 = sphi 0, %s37
      %s26 = sphi 0, %s33
      %s27 = sphi 0, %s25
      %s28 = sphi 0, %s26
      %s29 = sphi 0, %s27
      %s30 = sphi 0, %s28
      %s42 = sphi 0, %s44
      %s45 = sphi 0, %s42
      %s46 = sphi 0, %s45
      %s62 = sphi 0, %s46
      %s66 = sphi 0, %s66
      %s68 = sphi 0, %s66
      %s69 = sphi 0, %s68
      %s83 = sphi 0, %s69
      %s87 = sphi 0, %s87
      %s89 = sphi 0, %s87
      %s90 = sphi 0, %s89
      %s104 = sphi 0, %s90
      %s108 = sphi 0, %s108
      %s110 = sphi 0, %s108
      %s111 = sphi 0, %s110
      %s125 = sphi 0, %s111
      %s129 = sphi 0, %s129
      %s131 = sphi 0, %s129
      %s132 = sphi 0, %s131
      %s146 = sphi 0, %s132
      %s154 = sphi 0, %s156
      %s157 = sphi 0, %s154
      %s158 = sphi 0, %s157
      %s174 = sphi 0, %s158
    $region4: #{tpu_custom_call.1} parent=1 // loop_header_branch
      %21 = sbr.rel (%p19) target = $region8
    $region5: #{tpu_custom_call.1} parent=1 // loop_body
      %s23 = ssub.s32 %s18, 1
      %s24 = ssub.s32 %s18, 2
      %s31 = sadd.s32 1, %s26
      %p32 = scmp.ge.s32.totalorder %s31, 1
      %s33 = scalar_select %p32, 0, %s31
      %s34 = sadd.s32 1, %s25
      %s35 = scalar_select %p32, %s34, %s25
      %p36 = scmp.ge.s32.totalorder %s35, 2
      %s37 = scalar_select %p36, 0, %s35
      %s38 = ssub.s32 %s25, %s37
      %s39 = ssub.s32 %s26, %s33
      %s40 = sor.u32 %s38, %s39
      %p41 = scmp.eq.s32.totalorder %s40, 0
      %s43 = sadd.s32 %s42, 1
      %s44 = scalar_select %p41, %s42, %s43
      %p47 = pneg %p41
      %p48 = scmp.eq.s32.totalorder %s18, 1
      %p49 = por %p47, %p48
      %p50 = scmp.ne.s32.totalorder %s42, %s45
      %p51 = scmp.eq.s32.totalorder %s18, 0
      %p52 = por %p50, %p51
      %p53 = scmp.ne.s32.totalorder %s42, %s45
      %p54 = scmp.eq.s32.totalorder %s23, 1
      %p55 = por %p53, %p54
      %p56 = scmp.ne.s32.totalorder %s45, %s46
      %p57 = scmp.eq.s32.totalorder %s23, 0
      %p58 = por %p56, %p57
      %p59 = scmp.ne.s32.totalorder %s45, %s46
      %p60 = scmp.eq.s32.totalorder %s24, 1
      %p61 = por %p59, %p60
      %p63 = scmp.ne.s32.totalorder %s46, %s62
      %p64 = scmp.eq.s32.totalorder %s24, 0
      %p65 = por %p63, %p64
      %s67 = sadd.s32 %s66, 1
      %p70 = scmp.eq.s32.totalorder %s18, 1
      %p71 = scmp.ne.s32.totalorder %s66, %s68
      %p72 = scmp.eq.s32.totalorder %s18, 0
      %p73 = por %p71, %p72
      %p74 = scmp.ne.s32.totalorder %s66, %s68
      %p75 = scmp.eq.s32.totalorder %s23, 1
      %p76 = por %p74, %p75
      %p77 = scmp.ne.s32.totalorder %s68, %s69
      %p78 = scmp.eq.s32.totalorder %s23, 0
      %p79 = por %p77, %p78
      %p80 = scmp.ne.s32.totalorder %s68, %s69
      %p81 = scmp.eq.s32.totalorder %s24, 1
      %p82 = por %p80, %p81
      %p84 = scmp.ne.s32.totalorder %s69, %s83
      %p85 = scmp.eq.s32.totalorder %s24, 0
      %p86 = por %p84, %p85
      %s88 = sadd.s32 %s87, 1
      %p91 = scmp.eq.s32.totalorder %s18, 1
      %p92 = scmp.ne.s32.totalorder %s87, %s89
      %p93 = scmp.eq.s32.totalorder %s18, 0
      %p94 = por %p92, %p93
      %p95 = scmp.ne.s32.totalorder %s87, %s89
      %p96 = scmp.eq.s32.totalorder %s23, 1
      %p97 = por %p95, %p96
      %p98 = scmp.ne.s32.totalorder %s89, %s90
      %p99 = scmp.eq.s32.totalorder %s23, 0
      %p100 = por %p98, %p99
      %p101 = scmp.ne.s32.totalorder %s89, %s90
      %p102 = scmp.eq.s32.totalorder %s24, 1
      %p103 = por %p101, %p102
      %p105 = scmp.ne.s32.totalorder %s90, %s104
      %p106 = scmp.eq.s32.totalorder %s24, 0
      %p107 = por %p105, %p106
      %s109 = sadd.s32 %s108, 1
      %p112 = scmp.eq.s32.totalorder %s18, 1
      %p113 = scmp.ne.s32.totalorder %s108, %s110
      %p114 = scmp.eq.s32.totalorder %s18, 0
      %p115 = por %p113, %p114
      %p116 = scmp.ne.s32.totalorder %s108, %s110
      %p117 = scmp.eq.s32.totalorder %s23, 1
      %p118 = por %p116, %p117
      %p119 = scmp.ne.s32.totalorder %s110, %s111
      %p120 = scmp.eq.s32.totalorder %s23, 0
      %p121 = por %p119, %p120
      %p122 = scmp.ne.s32.totalorder %s110, %s111
      %p123 = scmp.eq.s32.totalorder %s24, 1
      %p124 = por %p122, %p123
      %p126 = scmp.ne.s32.totalorder %s111, %s125
      %p127 = scmp.eq.s32.totalorder %s24, 0
      %p128 = por %p126, %p127
      %s130 = sadd.s32 %s129, 1
      %p133 = scmp.eq.s32.totalorder %s18, 1
      %p134 = scmp.ne.s32.totalorder %s129, %s131
      %p135 = scmp.eq.s32.totalorder %s18, 0
      %p136 = por %p134, %p135
      %p137 = scmp.ne.s32.totalorder %s129, %s131
      %p138 = scmp.eq.s32.totalorder %s23, 1
      %p139 = por %p137, %p138
      %p140 = scmp.ne.s32.totalorder %s131, %s132
      %p141 = scmp.eq.s32.totalorder %s23, 0
      %p142 = por %p140, %p141
      %p143 = scmp.ne.s32.totalorder %s131, %s132
      %p144 = scmp.eq.s32.totalorder %s24, 1
      %p145 = por %p143, %p144
      %p147 = scmp.ne.s32.totalorder %s132, %s146
      %p148 = scmp.eq.s32.totalorder %s24, 0
      %p149 = por %p147, %p148
      %s150 = ssub.s32 %s25, %s37
      %s151 = ssub.s32 %s26, %s33
      %s152 = sor.u32 %s150, %s151
      %p153 = scmp.eq.s32.totalorder %s152, 0
      %s155 = sadd.s32 %s154, 1
      %s156 = scalar_select %p153, %s154, %s155
      %p159 = pneg %p153
      %p160 = scmp.eq.s32.totalorder %s18, 1
      %p161 = por %p159, %p160
      %p162 = scmp.ne.s32.totalorder %s154, %s157
      %p163 = scmp.eq.s32.totalorder %s18, 0
      %p164 = por %p162, %p163
      %p165 = scmp.ne.s32.totalorder %s154, %s157
      %p166 = scmp.eq.s32.totalorder %s23, 1
      %p167 = por %p165, %p166
      %p168 = scmp.ne.s32.totalorder %s157, %s158
      %p169 = scmp.eq.s32.totalorder %s23, 0
      %p170 = por %p168, %p169
      %p171 = scmp.ne.s32.totalorder %s157, %s158
      %p172 = scmp.eq.s32.totalorder %s24, 1
      %p173 = por %p171, %p172
      %p175 = scmp.ne.s32.totalorder %s158, %s174
      %p176 = scmp.eq.s32.totalorder %s24, 0
      %p177 = por %p175, %p176
      %p178 = scmp.le.s32.totalorder 1, %s18
      %p179 = scmp.lt.s32.totalorder %s18, 3
      %p180 = pnand %p178, %p179
      %p181 = pneg %p180
      // Predicated region
      $region9: #{tpu_custom_call.1} parent=5 // pred_check
        _
      $region10: #{tpu_custom_call.1} parent=5 // pred_check_branch
        %183 = sbr.rel (%p180) target = $region12
      $region11: #{tpu_custom_call.1} parent=5 // pred_region
        %s184 = ssub.s32 %s18, 1
        // Predicated region
        $region13: #{tpu_custom_call.1} parent=11 // pred_check
          %p185 = pneg %p79
        $region14: #{tpu_custom_call.1} parent=11 // pred_check_branch
          %187 = sbr.rel (%p185) target = $region16
        $region15: #{tpu_custom_call.1} parent=11 // pred_region
          _
        $region16: #{tpu_custom_call.1} parent=11 // pred_fallthru
          _
        // Predicated region
        $region17: #{tpu_custom_call.1} parent=11 // pred_check
          %p188 = pneg %p100
        $region18: #{tpu_custom_call.1} parent=11 // pred_check_branch
          %190 = sbr.rel (%p188) target = $region20
        $region19: #{tpu_custom_call.1} parent=11 // pred_region
          _
        $region20: #{tpu_custom_call.1} parent=11 // pred_fallthru
          _
        // Predicated region
        $region21: #{tpu_custom_call.1} parent=11 // pred_check
          %p191 = pneg %p121
        $region22: #{tpu_custom_call.1} parent=11 // pred_check_branch
          %193 = sbr.rel (%p191) target = $region24
        $region23: #{tpu_custom_call.1} parent=11 // pred_region
          %s195 = ssub.s32 256, 256
          %196 = vsyncadd [#allocation6], %s195
          %s197 = sshll.u32 [#allocation5], 4
          %s198 = int_to_ptr.vmem [resolvable:$true] %s197
          %203 = dma.hbm_to_vmem [thread:$0]  %s3, 256, %s198, [#allocation6], 64, 64, 4
        $region24: #{tpu_custom_call.1} parent=11 // pred_fallthru
          _
        // Predicated region
        $region25: #{tpu_custom_call.1} parent=11 // pred_check
          %p204 = pneg %p142
        $region26: #{tpu_custom_call.1} parent=11 // pred_check_branch
          %206 = sbr.rel (%p204) target = $region28
        $region27: #{tpu_custom_call.1} parent=11 // pred_region
          _
        $region28: #{tpu_custom_call.1} parent=11 // pred_fallthru
          _
      $region12: #{tpu_custom_call.1} parent=5 // pred_fallthru
        _
      %p207 = scmp.lt.s32.totalorder %s18, 2
      // Predicated region
      $region29: #{tpu_custom_call.1} parent=5 // pred_check
        %p208 = pneg %p207
      $region30: #{tpu_custom_call.1} parent=5 // pred_check_branch
        %210 = sbr.rel (%p208) target = $region32
      $region31: #{tpu_custom_call.1} parent=5 // pred_region
        // Predicated region
        $region33: #{tpu_custom_call.1} parent=31 // pred_check
          %p211 = pneg %p52
        $region34: #{tpu_custom_call.1} parent=31 // pred_check_branch
          %213 = sbr.rel (%p211) target = $region36
        $region35: #{tpu_custom_call.1} parent=31 // pred_region
          %s214 = sand.u32 %s42, 1
          %s215 = scalar_lea.sflag [#allocation3], %s214
          %s216 = sand.u32 %s42, 1
          %s217 = smul.addr %s216, 8
          %s218 = scalar_lea.vmem [#allocation2], %s217
          %s220 = ssub.s32 128, 128
          %221 = vsyncadd %s215, %s220
          %s222 = sadd.s32 %s26, %s25
          %s223 = smul.addr %s222, 128
          %s224 = scalar_lea.hbm %s0, %s223
          %s226 = sshll.u32 %s218, 4
          %s227 = int_to_ptr.vmem [resolvable:$true] %s226
          %229 = dma.hbm_to_vmem [thread:$0]  %s224, 128, %s227, %s215
        $region36: #{tpu_custom_call.1} parent=31 // pred_fallthru
          _
      $region32: #{tpu_custom_call.1} parent=5 // pred_fallthru
        _
      %p230 = scmp.le.s32.totalorder 1, %s18
      %p231 = scmp.lt.s32.totalorder %s18, 3
      %p232 = pnand %p230, %p231
      %p233 = pneg %p232
      // Predicated region
      $region37: #{tpu_custom_call.1} parent=5 // pred_check
        _
      $region38: #{tpu_custom_call.1} parent=5 // pred_check_branch
        %235 = sbr.rel (%p232) target = $region40
      $region39: #{tpu_custom_call.1} parent=5 // pred_region
        %s236 = ssub.s32 %s18, 1
        %s237 = sand.u32 %s45, 1
        %s238 = scalar_lea.sflag [#allocation3], %s237
        %s239 = sand.u32 %s45, 1
        %s240 = smul.addr %s239, 8
        %s241 = scalar_lea.vmem [#allocation2], %s240
        // Predicated region
        $region41: #{tpu_custom_call.1} parent=39 // pred_check
          %p242 = pneg %p58
        $region42: #{tpu_custom_call.1} parent=39 // pred_check_branch
          %244 = sbr.rel (%p242) target = $region44
        $region43: #{tpu_custom_call.1} parent=39 // pred_region
          %245 = dma.done %s238, 128
        $region44: #{tpu_custom_call.1} parent=39 // pred_fallthru
          _
        // Predicated region
        $region45: #{tpu_custom_call.1} parent=39 // pred_check
          %p246 = pneg %p121
        $region46: #{tpu_custom_call.1} parent=39 // pred_check_branch
          %248 = sbr.rel (%p246) target = $region48
        $region47: #{tpu_custom_call.1} parent=39 // pred_region
          %249 = dma.done [#allocation6], 256
        $region48: #{tpu_custom_call.1} parent=39 // pred_fallthru
          _
        %s250 = sand.u32 %s45, 1
        %s251 = scalar_lea.sflag [#allocation3], %s250
        %s252 = sand.u32 %s45, 1
        %s253 = smul.addr %s252, 8
        %s254 = scalar_lea.vmem [#allocation2], %s253
        %p255 = pneg %p58
        %p256 = pneg %p55
        %p257 = pneg %p79
        %p258 = pneg %p76
        %p259 = pneg %p100
        %p260 = pneg %p97
        %p261 = pneg %p121
        %p262 = pneg %p118
        %p263 = pneg %p142
        %p264 = pneg %p139
        %p265 = pneg %p170
        %p266 = pneg %p167
        %s267 = sand.u32 %s157, 1
        %s268 = scalar_lea.sflag [#allocation4], %s267
        %s269 = sand.u32 %s157, 1
        %s270 = smul.addr %s269, 4
        %s271 = scalar_lea.vmem [#allocation7], %s270
        %v273 = vld [vmem:[%s241] sm:$0xff]
        %vm274 = vcmask 261120
        %v275 = vsel %vm274, %v273, 0.0
        %276 = vadd.xlane.f32.xlu0 %v275
        %v277 = vpop.xlane.xlu0 %276
        %v278 = vrcp.pop 32.0
        %v279 = vmul.f32 %v277, %v278
        %v280 = vsub.f32 %v273, %v279
        %v281 = vmul.f32 %v280, %v280
        %v282 = vsel %vm274, %v281, 0.0
        %283 = vadd.xlane.f32.xlu0 %v282
        %v284 = vpop.xlane.xlu0 %283
        %v285 = vmul.f32 %v284, %v278
        %v286 = vadd.f32 %v285, 1e-06
        %v287 = vrsqrt.pop %v286
        %v288 = vmul.f32 %v280, %v287
        %v289 = vld [vmem:[%s1] sm:$0x1]
        %v291 = vlaneseq
        %v292 = vshrl.u32 %v291, 7
        %v293 = vsub.s32 0, %v292
        %v294 = vrot.slane %v289, %v293
        %v296 = vmul.f32 %v288, %v294
        %v297 = vld [vmem:[%s2] sm:$0x1]
        %v299 = vlaneseq
        %v300 = vshrl.u32 %v299, 7
        %v301 = vsub.s32 0, %v300
        %v302 = vrot.slane %v297, %v301
        %v304 = vadd.f32 %v296, %v302
        %v305 = vpack.c.bf16 %v304, %v304
        %v306 = vld [vmem:[#allocation5] sm:$0xf]
        %v307 = vld [vmem:[#allocation5 + $0x4] sm:$0xf]
        %v308 = vld [vmem:[#allocation5 + $0x8] sm:$0xf]
        %v309 = vld [vmem:[#allocation5 + $0xc] sm:$0xf]
        %v310 = vld [vmem:[%s4] sm:$0x1]
        %v312 = vlaneseq
        %v313 = vshrl.u32 %v312, 7
        %v314 = vsub.s32 0, %v313
        %v315 = vrot.slane %v310, %v314
        %v321 = vunpack.c.l.b16 %v306
        %v322 = vunpack.c.l.b16 %v307
        %v323 = vunpack.c.l.b16 %v308
        %v324 = vunpack.c.l.b16 %v309
        %v325 = vpack.c.b16 %v322, %v321
        %v326 = vpack.c.b16 %v324, %v323
        %v330 = vsel %vm274, %v305, 0
        %332 = vmatprep.subr.bf16.mxu0 0
        %333 = vmatpush1.bf16.msra.mxu0 0
        %334 = vmatprep.subr.bf16.mxu0 0
        %335 = vmatpush1.bf16.msra.mxu0 0
        %336 = vmatprep.subr.bf16.mxu0 0
        %337 = vmatpush1.bf16.msra.mxu0 0
        %338 = vmatprep.subr.bf16.mxu0 0
        %339 = vmatpush1.bf16.msra.mxu0 0
        %340 = vmatprep.subr.bf16.mxu0 0
        %341 = vmatpush1.bf16.msra.mxu0 0
        %342 = vmatprep.subr.bf16.mxu0 0
        %343 = vmatpush1.bf16.msra.mxu0 0
        %344 = vmatprep.subr.bf16.mxu0 0
        %345 = vmatpush1.bf16.msra.mxu0 %v326
        %346 = vmatprep.subr.bf16.mxu0 0
        %347 = vmatpush1.bf16.msra.mxu0 %v325
        %348 = vmatprep.subr.bf16.mxu0 0
        %349 = vmatpush2.bf16.msra.mxu0 0
        %350 = vmatprep.subr.bf16.mxu0 0
        %351 = vmatpush2.bf16.msra.mxu0 0
        %352 = vmatprep.subr.bf16.mxu0 0
        %353 = vmatpush2.bf16.msra.mxu0 0
        %354 = vmatprep.subr.bf16.mxu0 0
        %355 = vmatpush2.bf16.msra.mxu0 0
        %356 = vmatprep.subr.bf16.mxu0 0
        %357 = vmatpush2.bf16.msra.mxu0 0
        %358 = vmatprep.subr.bf16.mxu0 0
        %359 = vmatpush2.bf16.msra.mxu0 0
        %360 = vmatprep.subr.bf16.mxu0 0
        %361 = vmatpush2.bf16.msra.mxu0 0
        %362 = vmatprep.subr.bf16.mxu0 0
        %363 = vmatpush2.bf16.msra.mxu0 0
        %364 = vmatprep.mubr.bf16.mxu0 0
        %365 = vmatmul.mubr.bf16.gmra.mxu0 %v330
        %v366 = vpop.f32.mrf.mxu0
        %v367 = vadd.f32 %v315, %v366
        %v368 = vpop.f32.mrf.mxu0
        %v369 = vpop.f32.mrf.mxu0
        %v370 = vpop.f32.mrf.mxu0
        %371 = vdwg.mxu0
        %v372 = vpack.c.bf16 %v367, %v367
        %vm373 = vcmask 781312
        %374 = vst.msk [vmem:[%s271] sm:$0xf] %vm373, %v372
        %s375 = sand.u32 %s157, 1
        %s376 = scalar_lea.sflag [#allocation4], %s375
        %s377 = sand.u32 %s157, 1
        %s378 = smul.addr %s377, 4
        %s379 = scalar_lea.vmem [#allocation7], %s378
        // Predicated region
        $region49: #{tpu_custom_call.1} parent=39 // pred_check
          %p380 = pneg %p167
        $region50: #{tpu_custom_call.1} parent=39 // pred_check_branch
          %382 = sbr.rel (%p380) target = $region52
        $region51: #{tpu_custom_call.1} parent=39 // pred_region
          %s384 = ssub.s32 64, 64
          %385 = vsyncadd %s376, %s384
          %s386 = sadd.s32 %s28, %s27
          %s387 = smul.addr %s386, 64
          %s388 = scalar_lea.hbm %s5, %s387
          %s390 = sshll.u32 %s379, 4
          %s391 = int_to_ptr.vmem [resolvable:$true] %s390
          %393 = dma.vmem_to_hbm [thread:$0]  %s391, 64, %s388, %s376
        $region52: #{tpu_custom_call.1} parent=39 // pred_fallthru
          _
      $region40: #{tpu_custom_call.1} parent=5 // pred_fallthru
        _
      %p394 = scmp.le.s32.totalorder 2, %s18
      // Predicated region
      $region53: #{tpu_custom_call.1} parent=5 // pred_check
        %p395 = pneg %p394
      $region54: #{tpu_custom_call.1} parent=5 // pred_check_branch
        %397 = sbr.rel (%p395) target = $region56
      $region55: #{tpu_custom_call.1} parent=5 // pred_region
        %s398 = ssub.s32 %s18, 2
        // Predicated region
        $region57: #{tpu_custom_call.1} parent=55 // pred_check
          %p399 = pneg %p173
        $region58: #{tpu_custom_call.1} parent=55 // pred_check_branch
          %401 = sbr.rel (%p399) target = $region60
        $region59: #{tpu_custom_call.1} parent=55 // pred_region
          %s402 = sand.u32 %s158, 1
          %s403 = scalar_lea.sflag [#allocation4], %s402
          %s404 = sand.u32 %s158, 1
          %s405 = smul.addr %s404, 4
          %s406 = scalar_lea.vmem [#allocation7], %s405
          %407 = dma.done %s403, 64
        $region60: #{tpu_custom_call.1} parent=55 // pred_fallthru
          _
      $region56: #{tpu_custom_call.1} parent=5 // pred_fallthru
        _
    $region6: #{tpu_custom_call.1} parent=1 // loop_footer
      %s22 = sadd.s32 1, %s18
    $region7: #{tpu_custom_call.1} parent=1 // loop_footer_branch
      %17 = sbr.rel target = $region3
    $region8: #{tpu_custom_call.1} parent=1 // loop_exit
      _
    %408 = vsyncpa [#allocation3], 1
    %s409 = scalar_lea.sflag [#allocation3], 1
    %410 = vsyncpa %s409, 1
    %411 = vsyncpa [#allocation6], 1
    %412 = vsyncpa [#allocation4], 1
    %s413 = scalar_lea.sflag [#allocation4], 1
    %414 = vsyncpa %s413, 1

</llo_original>
